<compile_context>
chip_gen: v6e
topology: v6e:2x2x1
jax: 0.10.0
libtpu: 0.0.40
codegen_flags: <defaults>
</compile_context>

<pallas_src>
import functools

import jax
import jax.numpy as jnp
from jax.experimental import pallas as pl
from jax.experimental.pallas import tpu as pltpu

F = 128  # padded lane width for hidden feature dimensions (VMEM-resident only)


def _round_up(n, m):
    return (n + m - 1) // m * m


def _pad2(a, rows, cols):
    return jnp.pad(a, ((0, rows - a.shape[0]), (0, cols - a.shape[1])))


def mlp_kernel(x_ref,
               w1_ref, w2_ref, w3_ref, w4_ref,
               b123_ref, b4_ref,
               o_ref):
    """Fused 4-layer MLP on one (block_b, in_dim) batch tile.

    Inputs to each matmul are bf16 (MXU-native); accumulation, bias add and
    ReLU are f32 on the VPU. Hidden dims are zero-padded to 128 inside VMEM
    only, so the padding is mathematically inert and never touches HBM.
    """
    x = x_ref[...].astype(jnp.bfloat16)                          # (bb, in_dim)

    # fc1 + ReLU   (K = in_dim dot against (in_dim, 128) weight)
    h = jnp.dot(x, w1_ref[...], preferred_element_type=jnp.float32) + b123_ref[0:1, :]
    h = jnp.maximum(h, 0.0)
    # dropout -> identity (eval mode)

    # fc2 + ReLU
    h = jnp.dot(h.astype(jnp.bfloat16), w2_ref[...],
                preferred_element_type=jnp.float32) + b123_ref[1:2, :]
    h = jnp.maximum(h, 0.0)

    # fc3 + ReLU
    h = jnp.dot(h.astype(jnp.bfloat16), w3_ref[...],
                preferred_element_type=jnp.float32) + b123_ref[2:3, :]
    h = jnp.maximum(h, 0.0)

    # fc4 (no activation), narrow (bb, out_pad) result
    out = jnp.dot(h.astype(jnp.bfloat16), w4_ref[...],
                  preferred_element_type=jnp.float32) + b4_ref[...]

    o_ref[...] = out.astype(o_ref.dtype)


def prepack_params(params):
    """One-time prepack: pad hidden dims to 128, weights -> bf16, biases stay f32.

    Returns a tuple of arrays only (safe to pass through jit):
      (w1p (in_dim,128) bf16, w2p (128,128) bf16, w3p (128,128) bf16,
       w4p (128,out_pad) bf16, b123 (3,128) f32, b4p (1,out_pad) f32)
    """
    (w1, b1), (w2, b2), (w3, b3), (w4, b4) = params
    in_dim = w1.shape[0]
    out_dim = w4.shape[1]
    out_pad = _round_up(out_dim, 8)

    w1p = _pad2(w1, in_dim, F).astype(jnp.bfloat16)
    w2p = _pad2(w2, F, F).astype(jnp.bfloat16)
    w3p = _pad2(w3, F, F).astype(jnp.bfloat16)
    w4p = _pad2(w4, F, out_pad).astype(jnp.bfloat16)

    b123 = jnp.concatenate(
        [_pad2(b.reshape(1, -1), 1, F) for b in (b1, b2, b3)], axis=0
    ).astype(jnp.float32)                                        # (3, 128)
    b4p = _pad2(b4.reshape(1, -1), 1, out_pad).astype(jnp.float32)

    return (w1p, w2p, w3p, w4p, b123, b4p)


@functools.partial(jax.jit, static_argnames=("out_dim", "block_b"))
def mlp_forward(x, packed, *, out_dim=6, block_b=1024):
    w1p, w2p, w3p, w4p, b123, b4p = packed
    batch, in_dim = x.shape
    out_pad = w4p.shape[1]

    # Adaptive batch tile: large batches stream in block_b-row tiles; moderate
    # batches are split into >=2 grid steps (both v7x TensorCores busy); rows
    # rounded to 16 (bf16 sublane packing).
    if batch <= 16:
        bb = 16
    else:
        bb = min(block_b, _round_up(-(-batch // 2), 16))
    b_pad = _round_up(batch, bb)
    grid = (b_pad // bb,)

    # Only pad batch rows; feature dim stays narrow (in_dim) at the HBM boundary.
    xp = jnp.pad(x, ((0, b_pad - batch), (0, 0))).astype(jnp.float32)

    x_spec = pl.BlockSpec((bb, in_dim), lambda i: (i, 0))
    w1_spec = pl.BlockSpec((in_dim, F), lambda i: (0, 0))    # pinned / VMEM-resident
    w_spec = pl.BlockSpec((F, F), lambda i: (0, 0))
    w4_spec = pl.BlockSpec((F, out_pad), lambda i: (0, 0))
    b123_spec = pl.BlockSpec((3, F), lambda i: (0, 0))
    b4_spec = pl.BlockSpec((1, out_pad), lambda i: (0, 0))
    o_spec = pl.BlockSpec((bb, out_pad), lambda i: (i, 0))

    flops = 2 * batch * (in_dim * F + F * F + F * F + F * out_pad)
    bytes_accessed = (xp.size * 4
                      + (w1p.size + w2p.size + w3p.size + w4p.size) * 2
                      + (b123.size + b4p.size) * 4
                      + b_pad * out_pad * 4)

    out_padded = pl.pallas_call(
        mlp_kernel,
        out_shape=jax.ShapeDtypeStruct((b_pad, out_pad), jnp.float32),
        grid=grid,
        in_specs=[x_spec, w1_spec, w_spec, w_spec, w4_spec, b123_spec, b4_spec],
        out_specs=o_spec,
        compiler_params=pltpu.CompilerParams(
            dimension_semantics=("parallel",)),
        cost_estimate=pl.CostEstimate(
            flops=flops, transcendentals=0, bytes_accessed=bytes_accessed),
    )(xp, w1p, w2p, w3p, w4p, b123, b4p)

    # Slice off batch/column padding outside the kernel (cheap layout plumbing).
    return out_padded[:batch, :out_dim].astype(x.dtype)


def init_params(key, input_dim=8, hidden_dim=64, output_dim=6, dtype=jnp.float32):
    """Deterministic init matching nn.Linear shapes: W stored as (in, out), b as (1, out)."""
    dims = [(input_dim, hidden_dim),
            (hidden_dim, hidden_dim),
            (hidden_dim, hidden_dim // 2),
            (hidden_dim // 2, output_dim)]
    params = []
    for (fan_in, fan_out) in dims:
        key, kw, kb = jax.random.split(key, 3)
        bound = 1.0 / (fan_in ** 0.5)  # PyTorch nn.Linear default uniform bound
        w = jax.random.uniform(kw, (fan_in, fan_out), dtype, -bound, bound)
        b = jax.random.uniform(kb, (1, fan_out), dtype, -bound, bound)
        params.append((w, b))
    return params


if __name__ == "__main__":
    key = jax.random.PRNGKey(0)
    key, kx = jax.random.split(key)

    batch, input_dim, hidden_dim, output_dim = 8, 8, 64, 6
    x = jax.random.normal(kx, (batch, input_dim), jnp.float32)
    params = init_params(key, input_dim, hidden_dim, output_dim)
    packed = prepack_params(params)            # one-time prepack (outside jitted fwd)

    out = mlp_forward(x, packed, out_dim=output_dim)
    jax.block_until_ready(out)

    # Reference with matching numerics: bf16 inputs to each matmul, f32
    # accumulation, f32 bias add + ReLU; eval-mode dropout == identity.
    h = x
    for i, (w, b) in enumerate(params):
        h = jnp.dot(h.astype(jnp.bfloat16), w.astype(jnp.bfloat16),
                    preferred_element_type=jnp.float32) + b.reshape(1, -1)
        if i < 3:
            h = jnp.maximum(h, 0.0)

    assert out.shape == (batch, output_dim)
    assert jnp.allclose(out, h, atol=1e-3, rtol=1e-3), float(jnp.max(jnp.abs(out - h)))

    print("KERNEL_OK")
</pallas_src>

<mosaic_0001>
module attributes {stable_mosaic.version = 11 : i64} {
  func.func @mlp_kernel(%arg0: i32, %arg1: memref<16x8xf32, #tpu.memory_space<vmem>>, %arg2: memref<8x128xbf16, #tpu.memory_space<vmem>>, %arg3: memref<128x128xbf16, #tpu.memory_space<vmem>>, %arg4: memref<128x128xbf16, #tpu.memory_space<vmem>>, %arg5: memref<128x8xbf16, #tpu.memory_space<vmem>>, %arg6: memref<3x128xf32, #tpu.memory_space<vmem>>, %arg7: memref<1x8xf32, #tpu.memory_space<vmem>>, %arg8: memref<16x8xf32, #tpu.memory_space<vmem>>) attributes {dimension_semantics = [#tpu.dimension_semantics<parallel>], iteration_bounds = array<i64: 1>, scalar_prefetch = 0 : i64, scratch_operands = 0 : i64, tpu.core_type = #tpu.core_type<tc>, window_params = [{transform_indices = @transform_0, window_bounds = array<i64: 16, 8>}, {pipeline_mode = #tpu.pipeline_mode<synchronous>, transform_indices = @transform_1, window_bounds = array<i64: 8, 128>}, {pipeline_mode = #tpu.pipeline_mode<synchronous>, transform_indices = @transform_2, window_bounds = array<i64: 128, 128>}, {pipeline_mode = #tpu.pipeline_mode<synchronous>, transform_indices = @transform_3, window_bounds = array<i64: 128, 128>}, {pipeline_mode = #tpu.pipeline_mode<synchronous>, transform_indices = @transform_4, window_bounds = array<i64: 128, 8>}, {pipeline_mode = #tpu.pipeline_mode<synchronous>, transform_indices = @transform_5, window_bounds = array<i64: 3, 128>}, {pipeline_mode = #tpu.pipeline_mode<synchronous>, transform_indices = @transform_6, window_bounds = array<i64: 1, 8>}, {transform_indices = @transform_7, window_bounds = array<i64: 16, 8>}]} {
    %c0 = arith.constant 0 : index
    %c0_0 = arith.constant 0 : index
    %0 = vector.load %arg1[%c0, %c0_0] : memref<16x8xf32, #tpu.memory_space<vmem>>, vector<16x8xf32>
    %1 = arith.truncf %0 : vector<16x8xf32> to vector<16x8xbf16>
    %c0_1 = arith.constant 0 : index
    %c0_2 = arith.constant 0 : index
    %2 = vector.load %arg2[%c0_1, %c0_2] : memref<8x128xbf16, #tpu.memory_space<vmem>>, vector<8x128xbf16>
    %cst = arith.constant dense<0.000000e+00> : vector<16x128xf32>
    %3 = tpu.matmul %1, %2, %cst {dimension_numbers = #tpu.dot_dimension_numbers<[1], [0], [0], [1], [0, 0, 1, 1], [], []>} : vector<16x8xbf16>, vector<8x128xbf16>, vector<16x128xf32> -> vector<16x128xf32>
    %c0_3 = arith.constant 0 : index
    %c0_4 = arith.constant 0 : index
    %4 = vector.load %arg6[%c0_3, %c0_4] : memref<3x128xf32, #tpu.memory_space<vmem>>, vector<1x128xf32>
    %5 = vector.broadcast %4 : vector<1x128xf32> to vector<16x128xf32>
    %6 = arith.addf %3, %5 : vector<16x128xf32>
    %cst_5 = arith.constant 0.000000e+00 : f32
    %7 = vector.broadcast %cst_5 : f32 to vector<16x128xf32>
    %8 = arith.maximumf %6, %7 : vector<16x128xf32>
    %9 = arith.truncf %8 : vector<16x128xf32> to vector<16x128xbf16>
    %c0_6 = arith.constant 0 : index
    %c0_7 = arith.constant 0 : index
    %10 = vector.load %arg3[%c0_6, %c0_7] : memref<128x128xbf16, #tpu.memory_space<vmem>>, vector<128x128xbf16>
    %cst_8 = arith.constant dense<0.000000e+00> : vector<16x128xf32>
    %11 = tpu.matmul %9, %10, %cst_8 {dimension_numbers = #tpu.dot_dimension_numbers<[1], [0], [0], [1], [0, 0, 1, 1], [], []>} : vector<16x128xbf16>, vector<128x128xbf16>, vector<16x128xf32> -> vector<16x128xf32>
    %c1 = arith.constant 1 : index
    %c0_9 = arith.constant 0 : index
    %12 = vector.load %arg6[%c1, %c0_9] : memref<3x128xf32, #tpu.memory_space<vmem>>, vector<1x128xf32>
    %13 = vector.broadcast %12 : vector<1x128xf32> to vector<16x128xf32>
    %14 = arith.addf %11, %13 : vector<16x128xf32>
    %cst_10 = arith.constant 0.000000e+00 : f32
    %15 = vector.broadcast %cst_10 : f32 to vector<16x128xf32>
    %16 = arith.maximumf %14, %15 : vector<16x128xf32>
    %17 = arith.truncf %16 : vector<16x128xf32> to vector<16x128xbf16>
    %c0_11 = arith.constant 0 : index
    %c0_12 = arith.constant 0 : index
    %18 = vector.load %arg4[%c0_11, %c0_12] : memref<128x128xbf16, #tpu.memory_space<vmem>>, vector<128x128xbf16>
    %cst_13 = arith.constant dense<0.000000e+00> : vector<16x128xf32>
    %19 = tpu.matmul %17, %18, %cst_13 {dimension_numbers = #tpu.dot_dimension_numbers<[1], [0], [0], [1], [0, 0, 1, 1], [], []>} : vector<16x128xbf16>, vector<128x128xbf16>, vector<16x128xf32> -> vector<16x128xf32>
    %c2 = arith.constant 2 : index
    %c0_14 = arith.constant 0 : index
    %20 = vector.load %arg6[%c2, %c0_14] : memref<3x128xf32, #tpu.memory_space<vmem>>, vector<1x128xf32>
    %21 = vector.broadcast %20 : vector<1x128xf32> to vector<16x128xf32>
    %22 = arith.addf %19, %21 : vector<16x128xf32>
    %cst_15 = arith.constant 0.000000e+00 : f32
    %23 = vector.broadcast %cst_15 : f32 to vector<16x128xf32>
    %24 = arith.maximumf %22, %23 : vector<16x128xf32>
    %25 = arith.truncf %24 : vector<16x128xf32> to vector<16x128xbf16>
    %c0_16 = arith.constant 0 : index
    %c0_17 = arith.constant 0 : index
    %26 = vector.load %arg5[%c0_16, %c0_17] : memref<128x8xbf16, #tpu.memory_space<vmem>>, vector<128x8xbf16>
    %cst_18 = arith.constant dense<0.000000e+00> : vector<16x8xf32>
    %27 = tpu.matmul %25, %26, %cst_18 {dimension_numbers = #tpu.dot_dimension_numbers<[1], [0], [0], [1], [0, 0, 1, 1], [], []>} : vector<16x128xbf16>, vector<128x8xbf16>, vector<16x8xf32> -> vector<16x8xf32>
    %c0_19 = arith.constant 0 : index
    %c0_20 = arith.constant 0 : index
    %28 = vector.load %arg7[%c0_19, %c0_20] : memref<1x8xf32, #tpu.memory_space<vmem>>, vector<1x8xf32>
    %29 = vector.broadcast %28 : vector<1x8xf32> to vector<16x8xf32>
    %30 = arith.addf %27, %29 : vector<16x8xf32>
    %c0_21 = arith.constant 0 : index
    %c0_22 = arith.constant 0 : index
    %31 = vector.load %arg8[%c0_21, %c0_22] : memref<16x8xf32, #tpu.memory_space<vmem>>, vector<16x8xf32>
    tpu.vector_store %arg8[%c0_21, %c0_22], %30 {strides = array<i32>} : memref<16x8xf32, #tpu.memory_space<vmem>>, vector<16x8xf32>,
    return
  }
  func.func @transform_0(%arg0: i32) -> (i32, i32) {
    %c0_i32 = arith.constant 0 : i32
    %c0_i32_0 = arith.constant 0 : i32
    return %arg0, %c0_i32 : i32, i32
  }
  func.func @transform_1(%arg0: i32) -> (i32, i32) {
    %c0_i32 = arith.constant 0 : i32
    %c0_i32_0 = arith.constant 0 : i32
    %c0_i32_1 = arith.constant 0 : i32
    return %c0_i32, %c0_i32_0 : i32, i32
  }
  func.func @transform_2(%arg0: i32) -> (i32, i32) {
    %c0_i32 = arith.constant 0 : i32
    %c0_i32_0 = arith.constant 0 : i32
    %c0_i32_1 = arith.constant 0 : i32
    return %c0_i32, %c0_i32_0 : i32, i32
  }
  func.func @transform_3(%arg0: i32) -> (i32, i32) {
    %c0_i32 = arith.constant 0 : i32
    %c0_i32_0 = arith.constant 0 : i32
    %c0_i32_1 = arith.constant 0 : i32
    return %c0_i32, %c0_i32_0 : i32, i32
  }
  func.func @transform_4(%arg0: i32) -> (i32, i32) {
    %c0_i32 = arith.constant 0 : i32
    %c0_i32_0 = arith.constant 0 : i32
    %c0_i32_1 = arith.constant 0 : i32
    return %c0_i32, %c0_i32_0 : i32, i32
  }
  func.func @transform_5(%arg0: i32) -> (i32, i32) {
    %c0_i32 = arith.constant 0 : i32
    %c0_i32_0 = arith.constant 0 : i32
    %c0_i32_1 = arith.constant 0 : i32
    return %c0_i32, %c0_i32_0 : i32, i32
  }
  func.func @transform_6(%arg0: i32) -> (i32, i32) {
    %c0_i32 = arith.constant 0 : i32
    %c0_i32_0 = arith.constant 0 : i32
    %c0_i32_1 = arith.constant 0 : i32
    return %c0_i32, %c0_i32_0 : i32, i32
  }
  func.func @transform_7(%arg0: i32) -> (i32, i32) {
    %c0_i32 = arith.constant 0 : i32
    %c0_i32_0 = arith.constant 0 : i32
    return %arg0, %c0_i32 : i32, i32
  }
}

</mosaic_0001>

<llo_original>
// kernel: mlp_forward.1
$region0: #{mlp_forward.1}
  #allocation0 [shape = 'u32[]', space=smem, size = 0x4, offset = 0x4, fixed_abs, tag = 'smem constant byte address 0x4 - core index']
  #allocation1 [shape = 'u32[144,128]{1,0:T(1,128)}', space=vmem, size = 0x12000, scoped, tag = 'internal scratch']
  %s0 = inlined_call_operand.vmem [shape: f32[16,8], index: 0, kind: input, shape index: {}]
  %s1 = inlined_call_operand.vmem [shape: bf16[8,128], index: 1, kind: input, shape index: {}]
  %s2 = inlined_call_operand.vmem [shape: bf16[128,128], index: 2, kind: input, shape index: {}]
  %s3 = inlined_call_operand.hbm [shape: bf16[128,128], index: 3, kind: input, shape index: {}]
  %s4 = inlined_call_operand.vmem [shape: bf16[128,8], index: 4, kind: input, shape index: {}]
  %s5 = inlined_call_operand.vmem [shape: f32[3,128], index: 5, kind: input, shape index: {}]
  %s6 = inlined_call_operand.vmem [shape: f32[1,8], index: 6, kind: input, shape index: {}]
  %s7 = inlined_call_operand.vmem [shape: f32[16,8], index: 7, kind: output, shape index: {}]
  %s8 = sld [smem:[#allocation0]]
  $region42: #{mlp_forward.1} parent=0
    _
  %s10 = ssub.s32 1, %s8
  %s11 = scalar_select 0, %s10, %s8
  $region1: #{mlp_forward.1} parent=0
    #allocation2 [shape = 'u8[32768]{0}', space=vmem, size = 0x8000, scoped, tag = 'input window, operand 3, single buffered']
    #allocation3 [shape = 's32[1]{0}', space=sflag, size = 0x4, scoped, tag = 'scoped memory for mlp_forward.1']
    %12 = vsyncpa [#allocation3], 0
    // Predicated region
    $region2: #{mlp_forward.1} parent=1 // pred_check
      _
    $region3: #{mlp_forward.1} parent=1 // pred_check_branch
      %14 = sbr.rel (0) target = $region5
    $region4: #{mlp_forward.1} parent=1 // pred_region
      _
    $region5: #{mlp_forward.1} parent=1 // pred_fallthru
      _
    // Predicated region
    $region6: #{mlp_forward.1} parent=1 // pred_check
      _
    $region7: #{mlp_forward.1} parent=1 // pred_check_branch
      %16 = sbr.rel (0) target = $region9
    $region8: #{mlp_forward.1} parent=1 // pred_region
      _
    $region9: #{mlp_forward.1} parent=1 // pred_fallthru
      _
    // Predicated region
    $region10: #{mlp_forward.1} parent=1 // pred_check
      _
    $region11: #{mlp_forward.1} parent=1 // pred_check_branch
      %18 = sbr.rel (0) target = $region13
    $region12: #{mlp_forward.1} parent=1 // pred_region
      _
    $region13: #{mlp_forward.1} parent=1 // pred_fallthru
      _
    // Predicated region
    $region14: #{mlp_forward.1} parent=1 // pred_check
      _
    $region15: #{mlp_forward.1} parent=1 // pred_check_branch
      %20 = sbr.rel (0) target = $region17
    $region16: #{mlp_forward.1} parent=1 // pred_region
      %s22 = ssub.s32 1024, 1024
      %23 = vsyncadd [#allocation3], %s22
      %s24 = sshll.u32 [#allocation2], 4
      %s25 = int_to_ptr.vmem [resolvable:$true] %s24
      %30 = dma.hbm_to_vmem [thread:$0]  %s3, 1024, %s25, [#allocation3], 64, 64, 4
    $region17: #{mlp_forward.1} parent=1 // pred_fallthru
      _
    // Predicated region
    $region18: #{mlp_forward.1} parent=1 // pred_check
      _
    $region19: #{mlp_forward.1} parent=1 // pred_check_branch
      %32 = sbr.rel (0) target = $region21
    $region20: #{mlp_forward.1} parent=1 // pred_region
      _
    $region21: #{mlp_forward.1} parent=1 // pred_fallthru
      _
    // Predicated region
    $region22: #{mlp_forward.1} parent=1 // pred_check
      _
    $region23: #{mlp_forward.1} parent=1 // pred_check_branch
      %34 = sbr.rel (0) target = $region25
    $region24: #{mlp_forward.1} parent=1 // pred_region
      _
    $region25: #{mlp_forward.1} parent=1 // pred_fallthru
      _
    // Predicated region
    $region26: #{mlp_forward.1} parent=1 // pred_check
      _
    $region27: #{mlp_forward.1} parent=1 // pred_check_branch
      %36 = sbr.rel (0) target = $region29
    $region28: #{mlp_forward.1} parent=1 // pred_region
      _
    $region29: #{mlp_forward.1} parent=1 // pred_fallthru
      _
    // Predicated region
    $region30: #{mlp_forward.1} parent=1 // pred_check
      _
    $region31: #{mlp_forward.1} parent=1 // pred_check_branch
      %38 = sbr.rel (0) target = $region33
    $region32: #{mlp_forward.1} parent=1 // pred_region
      %39 = dma.done [#allocation3], 1024
    $region33: #{mlp_forward.1} parent=1 // pred_fallthru
      _
    %v41 = vld [vmem:[%s0] sm:$0xff]
    %v42 = vld [vmem:[%s0 + $0x8] sm:$0xff]
    %v43 = vpack.c.bf16 %v42, %v41
    %v44 = vld [vmem:[%s1] sm:$0xf]
    %v45 = vld [vmem:[%s5] sm:$0x1]
    %v46 = vlaneseq
    %v47 = vshrl.u32 %v46, 7
    %v48 = vsub.s32 0, %v47
    %v49 = vrot.slane %v45, %v48
    %vm50 = vcmask 64512
    %v52 = vsel %vm50, %v43, 0
    %vm54 = vcmask 1043456
    %v56 = vsel %vm54, %v44, 0
    %58 = vmatprep.subr.bf16.mxu0 0
    %59 = vmatpush1.bf16.msra.mxu0 0
    %60 = vmatprep.subr.bf16.mxu0 0
    %61 = vmatpush1.bf16.msra.mxu0 0
    %62 = vmatprep.subr.bf16.mxu0 0
    %63 = vmatpush1.bf16.msra.mxu0 0
    %64 = vmatprep.subr.bf16.mxu0 0
    %65 = vmatpush1.bf16.msra.mxu0 0
    %66 = vmatprep.subr.bf16.mxu0 0
    %67 = vmatpush1.bf16.msra.mxu0 0
    %68 = vmatprep.subr.bf16.mxu0 0
    %69 = vmatpush1.bf16.msra.mxu0 0
    %70 = vmatprep.subr.bf16.mxu0 0
    %71 = vmatpush1.bf16.msra.mxu0 0
    %72 = vmatprep.subr.bf16.mxu0 0
    %73 = vmatpush1.bf16.msra.mxu0 %v56
    %74 = vmatprep.subr.bf16.mxu0 0
    %75 = vmatpush2.bf16.msra.mxu0 0
    %76 = vmatprep.subr.bf16.mxu0 0
    %77 = vmatpush2.bf16.msra.mxu0 0
    %78 = vmatprep.subr.bf16.mxu0 0
    %79 = vmatpush2.bf16.msra.mxu0 0
    %80 = vmatprep.subr.bf16.mxu0 0
    %81 = vmatpush2.bf16.msra.mxu0 0
    %82 = vmatprep.subr.bf16.mxu0 0
    %83 = vmatpush2.bf16.msra.mxu0 0
    %84 = vmatprep.subr.bf16.mxu0 0
    %85 = vmatpush2.bf16.msra.mxu0 0
    %86 = vmatprep.subr.bf16.mxu0 0
    %87 = vmatpush2.bf16.msra.mxu0 0
    %88 = vmatprep.subr.bf16.mxu0 0
    %89 = vmatpush2.bf16.msra.mxu0 0
    %90 = vmatprep.mubr.bf16.mxu0 0
    %91 = vmatmul.mubr.bf16.gmra.mxu0 %v52
    %v92 = vpop.f32.mrf.mxu0
    %v93 = vadd.f32 %v49, %v92
    %v94 = vpop.f32.mrf.mxu0
    %v95 = vpop.f32.mrf.mxu0
    %v96 = vadd.f32 %v49, %v95
    %v97 = vpop.f32.mrf.mxu0
    %98 = vdwg.mxu0
    %v99 = vmax.f32 %v93, 0.0
    %v100 = vmax.f32 %v96, 0.0
    %v101 = vpack.c.bf16 %v100, %v99
    %v102 = vld [vmem:[%s2] sm:$0xf]
    %v103 = vld [vmem:[%s2 + $0x4] sm:$0xf]
    %v104 = vld [vmem:[%s2 + $0x8] sm:$0xf]
    %v105 = vld [vmem:[%s2 + $0xc] sm:$0xf]
    %v106 = vld [vmem:[%s2 + $0x10] sm:$0xf]
    %v107 = vld [vmem:[%s2 + $0x14] sm:$0xf]
    %v108 = vld [vmem:[%s2 + $0x18] sm:$0xf]
    %v109 = vld [vmem:[%s2 + $0x1c] sm:$0xf]
    %v110 = vld [vmem:[%s2 + $0x20] sm:$0xf]
    %v111 = vld [vmem:[%s2 + $0x24] sm:$0xf]
    %v112 = vld [vmem:[%s2 + $0x28] sm:$0xf]
    %v113 = vld [vmem:[%s2 + $0x2c] sm:$0xf]
    %v114 = vld [vmem:[%s2 + $0x30] sm:$0xf]
    %v115 = vld [vmem:[%s2 + $0x34] sm:$0xf]
    %v116 = vld [vmem:[%s2 + $0x38] sm:$0xf]
    %v117 = vld [vmem:[%s2 + $0x3c] sm:$0xf]
    %v118 = vld [vmem:[%s5 + $0x1] sm:$0x1]
    %v119 = vlaneseq
    %v120 = vshrl.u32 %v119, 7
    %v121 = vsub.s32 0, %v120
    %v122 = vrot.slane %v118, %v121
    %v139 = vunpack.c.l.b16 %v102
    %v140 = vunpack.c.l.b16 %v103
    %v141 = vunpack.c.l.b16 %v104
    %v142 = vunpack.c.l.b16 %v105
    %v143 = vunpack.c.l.b16 %v106
    %v144 = vunpack.c.l.b16 %v107
    %v145 = vunpack.c.l.b16 %v108
    %v146 = vunpack.c.l.b16 %v109
    %v147 = vunpack.c.l.b16 %v110
    %v148 = vunpack.c.l.b16 %v111
    %v149 = vunpack.c.l.b16 %v112
    %v150 = vunpack.c.l.b16 %v113
    %v151 = vunpack.c.l.b16 %v114
    %v152 = vunpack.c.l.b16 %v115
    %v153 = vunpack.c.l.b16 %v116
    %v154 = vunpack.c.l.b16 %v117
    %v155 = vpack.c.b16 %v140, %v139
    %v156 = vpack.c.b16 %v142, %v141
    %v157 = vpack.c.b16 %v144, %v143
    %v158 = vpack.c.b16 %v146, %v145
    %v159 = vpack.c.b16 %v148, %v147
    %v160 = vpack.c.b16 %v150, %v149
    %v161 = vpack.c.b16 %v152, %v151
    %v162 = vpack.c.b16 %v154, %v153
    %171 = vmatprep.subr.bf16.mxu0 0
    %172 = vmatpush1.bf16.msra.mxu0 %v162
    %173 = vmatprep.subr.bf16.mxu0 0
    %174 = vmatpush1.bf16.msra.mxu0 %v161
    %175 = vmatprep.subr.bf16.mxu0 0
    %176 = vmatpush1.bf16.msra.mxu0 %v160
    %177 = vmatprep.subr.bf16.mxu0 0
    %178 = vmatpush1.bf16.msra.mxu0 %v159
    %179 = vmatprep.subr.bf16.mxu0 0
    %180 = vmatpush1.bf16.msra.mxu0 %v158
    %181 = vmatprep.subr.bf16.mxu0 0
    %182 = vmatpush1.bf16.msra.mxu0 %v157
    %183 = vmatprep.subr.bf16.mxu0 0
    %184 = vmatpush1.bf16.msra.mxu0 %v156
    %185 = vmatprep.subr.bf16.mxu0 0
    %186 = vmatpush1.bf16.msra.mxu0 %v155
    %187 = vmatprep.subr.bf16.mxu0 0
    %188 = vmatpush2.bf16.msra.mxu0 0
    %189 = vmatprep.subr.bf16.mxu0 0
    %190 = vmatpush2.bf16.msra.mxu0 0
    %191 = vmatprep.subr.bf16.mxu0 0
    %192 = vmatpush2.bf16.msra.mxu0 0
    %193 = vmatprep.subr.bf16.mxu0 0
    %194 = vmatpush2.bf16.msra.mxu0 0
    %195 = vmatprep.subr.bf16.mxu0 0
    %196 = vmatpush2.bf16.msra.mxu0 0
    %197 = vmatprep.subr.bf16.mxu0 0
    %198 = vmatpush2.bf16.msra.mxu0 0
    %199 = vmatprep.subr.bf16.mxu0 0
    %200 = vmatpush2.bf16.msra.mxu0 0
    %201 = vmatprep.subr.bf16.mxu0 0
    %202 = vmatpush2.bf16.msra.mxu0 0
    %203 = vmatprep.mubr.bf16.mxu0 0
    %204 = vmatmul.mubr.bf16.gmra.mxu0 %v101
    %v205 = vpop.f32.mrf.mxu0
    %v206 = vadd.f32 %v122, %v205
    %v207 = vpop.f32.mrf.mxu0
    %v208 = vpop.f32.mrf.mxu0
    %v209 = vadd.f32 %v122, %v208
    %v210 = vpop.f32.mrf.mxu0
    %211 = vdwg.mxu0
    %v212 = vmax.f32 %v206, 0.0
    %v213 = vmax.f32 %v209, 0.0
    %v214 = vpack.c.bf16 %v213, %v212
    %v215 = vld [vmem:[#allocation2] sm:$0xf]
    %v216 = vld [vmem:[#allocation2 + $0x4] sm:$0xf]
    %v217 = vld [vmem:[#allocation2 + $0x8] sm:$0xf]
    %v218 = vld [vmem:[#allocation2 + $0xc] sm:$0xf]
    %v219 = vld [vmem:[#allocation2 + $0x10] sm:$0xf]
    %v220 = vld [vmem:[#allocation2 + $0x14] sm:$0xf]
    %v221 = vld [vmem:[#allocation2 + $0x18] sm:$0xf]
    %v222 = vld [vmem:[#allocation2 + $0x1c] sm:$0xf]
    %v223 = vld [vmem:[#allocation2 + $0x20] sm:$0xf]
    %v224 = vld [vmem:[#allocation2 + $0x24] sm:$0xf]
    %v225 = vld [vmem:[#allocation2 + $0x28] sm:$0xf]
    %v226 = vld [vmem:[#allocation2 + $0x2c] sm:$0xf]
    %v227 = vld [vmem:[#allocation2 + $0x30] sm:$0xf]
    %v228 = vld [vmem:[#allocation2 + $0x34] sm:$0xf]
    %v229 = vld [vmem:[#allocation2 + $0x38] sm:$0xf]
    %v230 = vld [vmem:[#allocation2 + $0x3c] sm:$0xf]
    %v231 = vld [vmem:[%s5 + $0x2] sm:$0x1]
    %v232 = vlaneseq
    %v233 = vshrl.u32 %v232, 7
    %v234 = vsub.s32 0, %v233
    %v235 = vrot.slane %v231, %v234
    %v252 = vunpack.c.l.b16 %v215
    %v253 = vunpack.c.l.b16 %v216
    %v254 = vunpack.c.l.b16 %v217
    %v255 = vunpack.c.l.b16 %v218
    %v256 = vunpack.c.l.b16 %v219
    %v257 = vunpack.c.l.b16 %v220
    %v258 = vunpack.c.l.b16 %v221
    %v259 = vunpack.c.l.b16 %v222
    %v260 = vunpack.c.l.b16 %v223
    %v261 = vunpack.c.l.b16 %v224
    %v262 = vunpack.c.l.b16 %v225
    %v263 = vunpack.c.l.b16 %v226
    %v264 = vunpack.c.l.b16 %v227
    %v265 = vunpack.c.l.b16 %v228
    %v266 = vunpack.c.l.b16 %v229
    %v267 = vunpack.c.l.b16 %v230
    %v268 = vpack.c.b16 %v253, %v252
    %v269 = vpack.c.b16 %v255, %v254
    %v270 = vpack.c.b16 %v257, %v256
    %v271 = vpack.c.b16 %v259, %v258
    %v272 = vpack.c.b16 %v261, %v260
    %v273 = vpack.c.b16 %v263, %v262
    %v274 = vpack.c.b16 %v265, %v264
    %v275 = vpack.c.b16 %v267, %v266
    %284 = vmatprep.subr.bf16.mxu0 0
    %285 = vmatpush1.bf16.msra.mxu0 %v275
    %286 = vmatprep.subr.bf16.mxu0 0
    %287 = vmatpush1.bf16.msra.mxu0 %v274
    %288 = vmatprep.subr.bf16.mxu0 0
    %289 = vmatpush1.bf16.msra.mxu0 %v273
    %290 = vmatprep.subr.bf16.mxu0 0
    %291 = vmatpush1.bf16.msra.mxu0 %v272
    %292 = vmatprep.subr.bf16.mxu0 0
    %293 = vmatpush1.bf16.msra.mxu0 %v271
    %294 = vmatprep.subr.bf16.mxu0 0
    %295 = vmatpush1.bf16.msra.mxu0 %v270
    %296 = vmatprep.subr.bf16.mxu0 0
    %297 = vmatpush1.bf16.msra.mxu0 %v269
    %298 = vmatprep.subr.bf16.mxu0 0
    %299 = vmatpush1.bf16.msra.mxu0 %v268
    %300 = vmatprep.subr.bf16.mxu0 0
    %301 = vmatpush2.bf16.msra.mxu0 0
    %302 = vmatprep.subr.bf16.mxu0 0
    %303 = vmatpush2.bf16.msra.mxu0 0
    %304 = vmatprep.subr.bf16.mxu0 0
    %305 = vmatpush2.bf16.msra.mxu0 0
    %306 = vmatprep.subr.bf16.mxu0 0
    %307 = vmatpush2.bf16.msra.mxu0 0
    %308 = vmatprep.subr.bf16.mxu0 0
    %309 = vmatpush2.bf16.msra.mxu0 0
    %310 = vmatprep.subr.bf16.mxu0 0
    %311 = vmatpush2.bf16.msra.mxu0 0
    %312 = vmatprep.subr.bf16.mxu0 0
    %313 = vmatpush2.bf16.msra.mxu0 0
    %314 = vmatprep.subr.bf16.mxu0 0
    %315 = vmatpush2.bf16.msra.mxu0 0
    %316 = vmatprep.mubr.bf16.mxu0 0
    %317 = vmatmul.mubr.bf16.gmra.mxu0 %v214
    %v318 = vpop.f32.mrf.mxu0
    %v319 = vadd.f32 %v235, %v318
    %v320 = vpop.f32.mrf.mxu0
    %v321 = vpop.f32.mrf.mxu0
    %v322 = vadd.f32 %v235, %v321
    %v323 = vpop.f32.mrf.mxu0
    %324 = vdwg.mxu0
    %v325 = vmax.f32 %v319, 0.0
    %v326 = vmax.f32 %v322, 0.0
    %v327 = vpack.c.bf16 %v326, %v325
    %v328 = vld [vmem:[%s4] sm:$0xf]
    %v329 = vld [vmem:[%s4 + $0x4] sm:$0xf]
    %v330 = vld [vmem:[%s4 + $0x8] sm:$0xf]
    %v331 = vld [vmem:[%s4 + $0xc] sm:$0xf]
    %v332 = vld [vmem:[%s4 + $0x10] sm:$0xf]
    %v333 = vld [vmem:[%s4 + $0x14] sm:$0xf]
    %v334 = vld [vmem:[%s4 + $0x18] sm:$0xf]
    %v335 = vld [vmem:[%s4 + $0x1c] sm:$0xf]
    %v336 = vld [vmem:[%s4 + $0x20] sm:$0xf]
    %v337 = vld [vmem:[%s4 + $0x24] sm:$0xf]
    %v338 = vld [vmem:[%s4 + $0x28] sm:$0xf]
    %v339 = vld [vmem:[%s4 + $0x2c] sm:$0xf]
    %v340 = vld [vmem:[%s4 + $0x30] sm:$0xf]
    %v341 = vld [vmem:[%s4 + $0x34] sm:$0xf]
    %v342 = vld [vmem:[%s4 + $0x38] sm:$0xf]
    %v343 = vld [vmem:[%s4 + $0x3c] sm:$0xf]
    %v344 = vld [vmem:[%s6] sm:$0x1]
    %v346 = vlaneseq
    %v347 = vshrl.u32 %v346, 7
    %v348 = vsub.s32 0, %v347
    %v349 = vrot.slane %v344, %v348
    %v367 = vunpack.c.l.b16 %v328
    %v368 = vunpack.c.l.b16 %v329
    %v369 = vunpack.c.l.b16 %v330
    %v370 = vunpack.c.l.b16 %v331
    %v371 = vunpack.c.l.b16 %v332
    %v372 = vunpack.c.l.b16 %v333
    %v373 = vunpack.c.l.b16 %v334
    %v374 = vunpack.c.l.b16 %v335
    %v375 = vunpack.c.l.b16 %v336
    %v376 = vunpack.c.l.b16 %v337
    %v377 = vunpack.c.l.b16 %v338
    %v378 = vunpack.c.l.b16 %v339
    %v379 = vunpack.c.l.b16 %v340
    %v380 = vunpack.c.l.b16 %v341
    %v381 = vunpack.c.l.b16 %v342
    %v382 = vunpack.c.l.b16 %v343
    %v383 = vpack.c.b16 %v368, %v367
    %v384 = vpack.c.b16 %v370, %v369
    %v385 = vpack.c.b16 %v372, %v371
    %v386 = vpack.c.b16 %v374, %v373
    %v387 = vpack.c.b16 %v376, %v375
    %v388 = vpack.c.b16 %v378, %v377
    %v389 = vpack.c.b16 %v380, %v379
    %v390 = vpack.c.b16 %v382, %v381
    %399 = vmatprep.subr.bf16.mxu0 0
    %400 = vmatpush1.bf16.msra.mxu0 %v390
    %401 = vmatprep.subr.bf16.mxu0 0
    %402 = vmatpush1.bf16.msra.mxu0 %v389
    %403 = vmatprep.subr.bf16.mxu0 0
    %404 = vmatpush1.bf16.msra.mxu0 %v388
    %405 = vmatprep.subr.bf16.mxu0 0
    %406 = vmatpush1.bf16.msra.mxu0 %v387
    %407 = vmatprep.subr.bf16.mxu0 0
    %408 = vmatpush1.bf16.msra.mxu0 %v386
    %409 = vmatprep.subr.bf16.mxu0 0
    %410 = vmatpush1.bf16.msra.mxu0 %v385
    %411 = vmatprep.subr.bf16.mxu0 0
    %412 = vmatpush1.bf16.msra.mxu0 %v384
    %413 = vmatprep.subr.bf16.mxu0 0
    %414 = vmatpush1.bf16.msra.mxu0 %v383
    %415 = vmatprep.subr.bf16.mxu0 0
    %416 = vmatpush2.bf16.msra.mxu0 0
    %417 = vmatprep.subr.bf16.mxu0 0
    %418 = vmatpush2.bf16.msra.mxu0 0
    %419 = vmatprep.subr.bf16.mxu0 0
    %420 = vmatpush2.bf16.msra.mxu0 0
    %421 = vmatprep.subr.bf16.mxu0 0
    %422 = vmatpush2.bf16.msra.mxu0 0
    %423 = vmatprep.subr.bf16.mxu0 0
    %424 = vmatpush2.bf16.msra.mxu0 0
    %425 = vmatprep.subr.bf16.mxu0 0
    %426 = vmatpush2.bf16.msra.mxu0 0
    %427 = vmatprep.subr.bf16.mxu0 0
    %428 = vmatpush2.bf16.msra.mxu0 0
    %429 = vmatprep.subr.bf16.mxu0 0
    %430 = vmatpush2.bf16.msra.mxu0 0
    %431 = vmatprep.mubr.bf16.mxu0 0
    %432 = vmatmul.mubr.bf16.gmra.mxu0 %v327
    %v433 = vpop.f32.mrf.mxu0
    %v434 = vadd.f32 %v349, %v433
    %v435 = vpop.f32.mrf.mxu0
    %v436 = vpop.f32.mrf.mxu0
    %v437 = vadd.f32 %v349, %v436
    %v438 = vpop.f32.mrf.mxu0
    %439 = vdwg.mxu0
    %440 = vst.msk [vmem:[%s7] sm:$0xff] %vm50, %v434
    %441 = vst.msk [vmem:[%s7 + $0x8] sm:$0xff] %vm50, %v437
    // Predicated region
    $region34: #{mlp_forward.1} parent=1 // pred_check
      _
    $region35: #{mlp_forward.1} parent=1 // pred_check_branch
      %443 = sbr.rel (0) target = $region37
    $region36: #{mlp_forward.1} parent=1 // pred_region
      _
    $region37: #{mlp_forward.1} parent=1 // pred_fallthru
      _
    // Predicated region
    $region38: #{mlp_forward.1} parent=1 // pred_check
      _
    $region39: #{mlp_forward.1} parent=1 // pred_check_branch
      %445 = sbr.rel (0) target = $region41
    $region40: #{mlp_forward.1} parent=1 // pred_region
      _
    $region41: #{mlp_forward.1} parent=1 // pred_fallthru
      _
    %446 = vsyncpa [#allocation3], 1

</llo_original>
